<compile_context>
chip_gen: v7x
topology: tpu7x:2x2x1
jax: 0.10.0
libtpu: 0.0.40
codegen_flags: <defaults>
</compile_context>

<pallas_src>
import jax
import jax.numpy as jnp
from jax.experimental import pallas as pl
from jax.experimental.pallas import tpu as pltpu


def attention_kernel(w1_ref, w3_ref, x_ref, out_ref):
    # w1_ref : (C,) SMEM   conv1 weight (C -> 1)
    # w3_ref : (C,) SMEM   conv3 weight with the final ReLU folded in: max(w3, 0)
    # x_ref  : (BN, C, S, 128) VMEM  -- pixels dense on (sublane, lane)
    # out_ref: (BN, C, S, 128) VMEM
    C = x_ref.shape[1]

    # conv1 (C -> 1): per-pixel dot over channels as C dense multiply-adds (VPU).
    feat = x_ref[:, 0, :, :] * w1_ref[0]
    for c in range(1, C):
        feat = feat + x_ref[:, c, :, :] * w1_ref[c]
    feat = jnp.maximum(feat, 0.0)            # relu(conv1(x)); attn factor == 1.0

    # conv3 (1 -> C): per-pixel scale by max(w3[c], 0) (second ReLU pre-folded).
    for c in range(C):
        out_ref[:, c, :, :] = (w3_ref[c] * feat).astype(out_ref.dtype)


def _plan_tiles(n, hw, c, itemsize, target_tile_bytes):
    """Choose (hw_pad, s_total, bn, s_tile) for the (N, C, S, 128) layout."""
    s_total = -(-hw // 128)                  # sublane rows per image (128 px each)
    bytes_per_row = c * 128 * itemsize       # input bytes per sublane row
    max_rows = max(1, target_tile_bytes // bytes_per_row)

    if s_total <= max_rows:
        # Whole image per step; stack batch images until the tile is big enough.
        bn = min(n, max(1, max_rows // s_total))
        while n % bn:
            bn -= 1
        s_tile = s_total
    else:
        # Tile within an image: pad rows to a multiple of 8 so an (8,128)-legal
        # divisor always exists, then take the largest mult-of-8 divisor that
        # fits the byte budget.
        s_total = -(-s_total // 8) * 8
        bn = 1
        s_tile = 8
        for t in range(8 * (max_rows // 8), 7, -8):
            if s_total % t == 0:
                s_tile = t
                break

    # Prefer >=2 grid steps so both v7x TensorCores get work (megacore).
    if (n // bn) * (s_total // s_tile) < 2:
        if bn > 1:
            bn //= 2
            while bn > 1 and n % bn:
                bn -= 1
        elif s_tile == s_total and s_total % 16 == 0:
            s_tile = s_total // 2

    return s_total * 128, s_total, bn, s_tile


def attention_module_pallas(x_nchw, attn_nchw, w1, w2, w3, *,
                            target_tile_bytes=8 << 20):
    """x: (N, C, H, W); attn: (N, 1, H, W); w1: (C, 1) [conv1 weight squeezed],
    w2: (1, 1) [conv2 weight], w3: (1, C) [conv3 weight squeezed].
    attn/w2 are mathematically dead: Softmax2d over one channel == 1.0."""
    N, C, H, W = x_nchw.shape
    # Guard the Softmax2d==1.0 shortcut: only valid for a 1-channel attn map.
    assert attn_nchw.shape[1] == 1 and w2.shape == (1, 1), (
        "attention shortcut requires a single attention channel")
    del attn_nchw, w2

    HW = H * W
    itemsize = jnp.dtype(x_nchw.dtype).itemsize
    hw_pad, s_total, bn, s_tile = _plan_tiles(N, HW, C, itemsize,
                                              target_tile_bytes)

    # Relayout: NCHW -> (N, C, HW/128, 128).  Zero-copy when HW % 128 == 0,
    # otherwise zero-pad the pixel axis so stores stay lane-dense.
    x_flat = x_nchw.reshape(N, C, HW)
    if hw_pad != HW:
        x_flat = jnp.pad(x_flat, ((0, 0), (0, 0), (0, hw_pad - HW)))
    x4 = x_flat.reshape(N, C, s_total, 128)

    w1_vec = w1.reshape(C).astype(jnp.float32)                    # conv1
    w3_vec = jnp.maximum(w3.reshape(C), 0.0).astype(jnp.float32)  # conv3 + ReLU fold

    grid = (N // bn, s_total // s_tile)
    block = (bn, C, s_tile, 128)

    out4 = pl.pallas_call(
        attention_kernel,
        out_shape=jax.ShapeDtypeStruct((N, C, s_total, 128), x_nchw.dtype),
        grid_spec=pltpu.PrefetchScalarGridSpec(
            num_scalar_prefetch=0,
            grid=grid,
            in_specs=[
                pl.BlockSpec(memory_space=pltpu.MemorySpace.SMEM),  # w1 (C,)
                pl.BlockSpec(memory_space=pltpu.MemorySpace.SMEM),  # w3 (C,)
                pl.BlockSpec(block, lambda b, s: (b, 0, s, 0)),     # x tile
            ],
            out_specs=pl.BlockSpec(block, lambda b, s: (b, 0, s, 0)),
        ),
        compiler_params=pltpu.CompilerParams(
            dimension_semantics=("parallel", "parallel"),
            vmem_limit_bytes=48 << 20),   # headroom under v7x 64 MiB physical
    )(w1_vec, w3_vec, x4)

    out_flat = out4.reshape(N, C, hw_pad)
    if hw_pad != HW:
        out_flat = out_flat[:, :, :HW]
    return out_flat.reshape(N, C, H, W)


def attention_module_ref(x_nchw, attn_nchw, w1, w2, w3):
    """Pure-JAX reference mirroring the full PyTorch forward (incl. attn path)."""
    a = attn_nchw * w2[0, 0]                                      # conv2
    a = jax.nn.softmax(a, axis=1)                                 # Softmax2d
    feat = jnp.einsum('nchw,c->nhw', x_nchw, w1[:, 0])[:, None]   # conv1
    feat = jnp.maximum(feat, 0.0)
    out = feat * a
    out = jnp.einsum('nihw,c->nchw', out, w3[0])                  # conv3
    return jnp.maximum(out, 0.0)


if __name__ == "__main__":
    N, C, H, W = 2, 4, 16, 16
    key = jax.random.PRNGKey(0)
    kx, ka, k1, k2, k3 = jax.random.split(key, 5)

    x = jax.random.normal(kx, (N, C, H, W), dtype=jnp.float32)
    attn = jax.random.normal(ka, (N, 1, H, W), dtype=jnp.float32)

    # Parameter shapes match the PyTorch module's 1x1 convs, squeezed of their
    # trailing 1x1 kernel dims.
    w1 = jax.random.normal(k1, (C, 1), dtype=jnp.float32) * 0.5   # conv1: (1,C,1,1)
    w2 = jax.random.normal(k2, (1, 1), dtype=jnp.float32) * 0.5   # conv2: (1,1,1,1)
    w3 = jax.random.normal(k3, (1, C), dtype=jnp.float32) * 0.5   # conv3: (C,1,1,1)

    out = attention_module_pallas(x, attn, w1, w2, w3)
    out = jax.block_until_ready(out)

    ref = attention_module_ref(x, attn, w1, w2, w3)
    assert out.shape == (N, C, H, W)
    assert jnp.allclose(out, ref, atol=1e-5, rtol=1e-5), "mismatch vs reference"

    print("KERNEL_OK")
</pallas_src>

<mosaic_0001>
module attributes {stable_mosaic.version = 11 : i64} {
  func.func @attention_kernel(%arg0: i32, %arg1: i32, %arg2: memref<4xf32, #tpu.memory_space<smem>>, %arg3: memref<4xf32, #tpu.memory_space<smem>>, %arg4: memref<1x4x2x128xf32, #tpu.memory_space<vmem>>, %arg5: memref<1x4x2x128xf32, #tpu.memory_space<vmem>>) attributes {dimension_semantics = [#tpu.dimension_semantics<parallel>, #tpu.dimension_semantics<parallel>], iteration_bounds = array<i64: 2, 1>, scalar_prefetch = 0 : i64, scratch_operands = 0 : i64, tpu.core_type = #tpu.core_type<tc>, window_params = [{transform_indices = @transform_0, window_bounds = array<i64: 4>}, {transform_indices = @transform_1, window_bounds = array<i64: 4>}, {transform_indices = @transform_2, window_bounds = array<i64: 1, 4, 2, 128>}, {transform_indices = @transform_3, window_bounds = array<i64: 1, 4, 2, 128>}]} {
    %c0 = arith.constant 0 : index
    %c0_0 = arith.constant 0 : index
    %c0_1 = arith.constant 0 : index
    %c0_2 = arith.constant 0 : index
    %0 = vector.load %arg4[%c0, %c0_0, %c0_1, %c0_2] : memref<1x4x2x128xf32, #tpu.memory_space<vmem>>, vector<1x1x2x128xf32>
    %1 = vector.shape_cast %0 : vector<1x1x2x128xf32> to vector<1x2x128xf32>
    %c0_3 = arith.constant 0 : index
    %2 = memref.load %arg2[%c0_3] : memref<4xf32, #tpu.memory_space<smem>>
    %3 = vector.broadcast %2 : f32 to vector<1x2x128xf32>
    %4 = arith.mulf %1, %3 : vector<1x2x128xf32>
    %c0_4 = arith.constant 0 : index
    %c1 = arith.constant 1 : index
    %c0_5 = arith.constant 0 : index
    %c0_6 = arith.constant 0 : index
    %5 = vector.load %arg4[%c0_4, %c1, %c0_5, %c0_6] : memref<1x4x2x128xf32, #tpu.memory_space<vmem>>, vector<1x1x2x128xf32>
    %6 = vector.shape_cast %5 : vector<1x1x2x128xf32> to vector<1x2x128xf32>
    %c1_7 = arith.constant 1 : index
    %7 = memref.load %arg2[%c1_7] : memref<4xf32, #tpu.memory_space<smem>>
    %8 = vector.broadcast %7 : f32 to vector<1x2x128xf32>
    %9 = arith.mulf %6, %8 : vector<1x2x128xf32>
    %10 = arith.addf %4, %9 : vector<1x2x128xf32>
    %c0_8 = arith.constant 0 : index
    %c2 = arith.constant 2 : index
    %c0_9 = arith.constant 0 : index
    %c0_10 = arith.constant 0 : index
    %11 = vector.load %arg4[%c0_8, %c2, %c0_9, %c0_10] : memref<1x4x2x128xf32, #tpu.memory_space<vmem>>, vector<1x1x2x128xf32>
    %12 = vector.shape_cast %11 : vector<1x1x2x128xf32> to vector<1x2x128xf32>
    %c2_11 = arith.constant 2 : index
    %13 = memref.load %arg2[%c2_11] : memref<4xf32, #tpu.memory_space<smem>>
    %14 = vector.broadcast %13 : f32 to vector<1x2x128xf32>
    %15 = arith.mulf %12, %14 : vector<1x2x128xf32>
    %16 = arith.addf %10, %15 : vector<1x2x128xf32>
    %c0_12 = arith.constant 0 : index
    %c3 = arith.constant 3 : index
    %c0_13 = arith.constant 0 : index
    %c0_14 = arith.constant 0 : index
    %17 = vector.load %arg4[%c0_12, %c3, %c0_13, %c0_14] : memref<1x4x2x128xf32, #tpu.memory_space<vmem>>, vector<1x1x2x128xf32>
    %18 = vector.shape_cast %17 : vector<1x1x2x128xf32> to vector<1x2x128xf32>
    %c3_15 = arith.constant 3 : index
    %19 = memref.load %arg2[%c3_15] : memref<4xf32, #tpu.memory_space<smem>>
    %20 = vector.broadcast %19 : f32 to vector<1x2x128xf32>
    %21 = arith.mulf %18, %20 : vector<1x2x128xf32>
    %22 = arith.addf %16, %21 : vector<1x2x128xf32>
    %cst = arith.constant 0.000000e+00 : f32
    %23 = vector.broadcast %cst : f32 to vector<1x2x128xf32>
    %24 = arith.maximumf %22, %23 : vector<1x2x128xf32>
    %c0_16 = arith.constant 0 : index
    %25 = memref.load %arg3[%c0_16] : memref<4xf32, #tpu.memory_space<smem>>
    %26 = vector.broadcast %25 : f32 to vector<1x2x128xf32>
    %27 = arith.mulf %26, %24 : vector<1x2x128xf32>
    %c0_17 = arith.constant 0 : index
    %c0_18 = arith.constant 0 : index
    %c0_19 = arith.constant 0 : index
    %c0_20 = arith.constant 0 : index
    %28 = vector.load %arg5[%c0_17, %c0_18, %c0_19, %c0_20] : memref<1x4x2x128xf32, #tpu.memory_space<vmem>>, vector<1x1x2x128xf32>
    %29 = vector.shape_cast %28 : vector<1x1x2x128xf32> to vector<1x2x128xf32>
    %30 = vector.shape_cast %27 : vector<1x2x128xf32> to vector<1x1x2x128xf32>
    tpu.vector_store %arg5[%c0_17, %c0_18, %c0_19, %c0_20], %30 {strides = array<i32>} : memref<1x4x2x128xf32, #tpu.memory_space<vmem>>, vector<1x1x2x128xf32>,
    %c1_21 = arith.constant 1 : index
    %31 = memref.load %arg3[%c1_21] : memref<4xf32, #tpu.memory_space<smem>>
    %32 = vector.broadcast %31 : f32 to vector<1x2x128xf32>
    %33 = arith.mulf %32, %24 : vector<1x2x128xf32>
    %c0_22 = arith.constant 0 : index
    %c1_23 = arith.constant 1 : index
    %c0_24 = arith.constant 0 : index
    %c0_25 = arith.constant 0 : index
    %34 = vector.load %arg5[%c0_22, %c1_23, %c0_24, %c0_25] : memref<1x4x2x128xf32, #tpu.memory_space<vmem>>, vector<1x1x2x128xf32>
    %35 = vector.shape_cast %34 : vector<1x1x2x128xf32> to vector<1x2x128xf32>
    %36 = vector.shape_cast %33 : vector<1x2x128xf32> to vector<1x1x2x128xf32>
    tpu.vector_store %arg5[%c0_22, %c1_23, %c0_24, %c0_25], %36 {strides = array<i32>} : memref<1x4x2x128xf32, #tpu.memory_space<vmem>>, vector<1x1x2x128xf32>,
    %c2_26 = arith.constant 2 : index
    %37 = memref.load %arg3[%c2_26] : memref<4xf32, #tpu.memory_space<smem>>
    %38 = vector.broadcast %37 : f32 to vector<1x2x128xf32>
    %39 = arith.mulf %38, %24 : vector<1x2x128xf32>
    %c0_27 = arith.constant 0 : index
    %c2_28 = arith.constant 2 : index
    %c0_29 = arith.constant 0 : index
    %c0_30 = arith.constant 0 : index
    %40 = vector.load %arg5[%c0_27, %c2_28, %c0_29, %c0_30] : memref<1x4x2x128xf32, #tpu.memory_space<vmem>>, vector<1x1x2x128xf32>
    %41 = vector.shape_cast %40 : vector<1x1x2x128xf32> to vector<1x2x128xf32>
    %42 = vector.shape_cast %39 : vector<1x2x128xf32> to vector<1x1x2x128xf32>
    tpu.vector_store %arg5[%c0_27, %c2_28, %c0_29, %c0_30], %42 {strides = array<i32>} : memref<1x4x2x128xf32, #tpu.memory_space<vmem>>, vector<1x1x2x128xf32>,
    %c3_31 = arith.constant 3 : index
    %43 = memref.load %arg3[%c3_31] : memref<4xf32, #tpu.memory_space<smem>>
    %44 = vector.broadcast %43 : f32 to vector<1x2x128xf32>
    %45 = arith.mulf %44, %24 : vector<1x2x128xf32>
    %c0_32 = arith.constant 0 : index
    %c3_33 = arith.constant 3 : index
    %c0_34 = arith.constant 0 : index
    %c0_35 = arith.constant 0 : index
    %46 = vector.load %arg5[%c0_32, %c3_33, %c0_34, %c0_35] : memref<1x4x2x128xf32, #tpu.memory_space<vmem>>, vector<1x1x2x128xf32>
    %47 = vector.shape_cast %46 : vector<1x1x2x128xf32> to vector<1x2x128xf32>
    %48 = vector.shape_cast %45 : vector<1x2x128xf32> to vector<1x1x2x128xf32>
    tpu.vector_store %arg5[%c0_32, %c3_33, %c0_34, %c0_35], %48 {strides = array<i32>} : memref<1x4x2x128xf32, #tpu.memory_space<vmem>>, vector<1x1x2x128xf32>,
    return
  }
  func.func @transform_0(%arg0: i32, %arg1: i32) -> i32 {
    %c0_i32 = arith.constant 0 : i32
    %c0_i32_0 = arith.constant 0 : i32
    return %c0_i32 : i32
  }
  func.func @transform_1(%arg0: i32, %arg1: i32) -> i32 {
    %c0_i32 = arith.constant 0 : i32
    %c0_i32_0 = arith.constant 0 : i32
    return %c0_i32 : i32
  }
  func.func @transform_2(%arg0: i32, %arg1: i32) -> (i32, i32, i32, i32) {
    %c0_i32 = arith.constant 0 : i32
    %c0_i32_0 = arith.constant 0 : i32
    %c0_i32_1 = arith.constant 0 : i32
    return %arg0, %c0_i32, %arg1, %c0_i32_0 : i32, i32, i32, i32
  }
  func.func @transform_3(%arg0: i32, %arg1: i32) -> (i32, i32, i32, i32) {
    %c0_i32 = arith.constant 0 : i32
    %c0_i32_0 = arith.constant 0 : i32
    %c0_i32_1 = arith.constant 0 : i32
    return %arg0, %c0_i32, %arg1, %c0_i32_0 : i32, i32, i32, i32
  }
}

</mosaic_0001>

<llo_original>
// kernel: tpu_custom_call.1
$region0: #{tpu_custom_call.1}
  #allocation0 [shape = 'u32[]', space=smem, size = 0x4, offset = 0x4, fixed_abs, tag = 'smem constant byte address 0x4 - core index']
  #allocation1 [shape = 'u32[144,128]{1,0:T(1,128)}', space=vmem, size = 0x12000, scoped, tag = 'internal scratch']
  %s0 = inlined_call_operand.hbm [shape: f32[4], index: 0, kind: input, shape index: {}]
  %s1 = inlined_call_operand.vmem [shape: f32[4], index: 1, kind: input, shape index: {}]
  %s2 = inlined_call_operand.hbm [shape: f32[2,4,2,128], index: 2, kind: input, shape index: {}]
  %s3 = inlined_call_operand.hbm [shape: f32[2,4,2,128], index: 3, kind: output, shape index: {}]
  %s4 = sld [smem:[#allocation0]]
  $region57: #{tpu_custom_call.1} parent=0
    _
  %s6 = ssub.s32 1, %s4
  %s7 = scalar_select 0, %s6, %s4
  $region1: #{tpu_custom_call.1} parent=0
    #allocation2 [shape = 'u8[512]{0}', space=smem, size = 0x200, scoped, tag = 'input window, operand 0, single buffered']
    #allocation3 [shape = 's32[2]{0}', space=sflag, size = 0x8, scoped, tag = 'scoped memory for tpu_custom_call.1']
    #allocation4 [shape = 's32[2]{0}', space=sflag, size = 0x8, scoped, tag = 'scoped memory for tpu_custom_call.1']
    #allocation5 [shape = 's32[2]{0}', space=sflag, size = 0x8, scoped, tag = 'scoped memory for tpu_custom_call.1']
    #allocation6 [shape = 's32[2]{0}', space=sflag, size = 0x8, scoped, tag = 'scoped memory for tpu_custom_call.1']
    #allocation7 [shape = 'u8[512]{0}', space=smem, size = 0x200, scoped, tag = 'input window, operand 1, single buffered']
    #allocation8 [shape = 'u8[8192]{0}', space=vmem, size = 0x2000, scoped, tag = 'input window, operand 2']
    #allocation9 [shape = 'u8[8192]{0}', space=vmem, size = 0x2000, scoped, tag = 'output window, operand 0']
    %8 = vsyncpa [#allocation5], 0
    %9 = vsyncpa [#allocation6], 0
    %10 = vsyncpa [#allocation3], 0
    %s11 = scalar_lea.sflag [#allocation3], 1
    %12 = vsyncpa %s11, 0
    %13 = vsyncpa [#allocation4], 0
    %s14 = scalar_lea.sflag [#allocation4], 1
    %15 = vsyncpa %s14, 0
    loop: start=0, step=1, limit=4
    $region2: #{tpu_custom_call.1} parent=1 // loop_pre_header
      _
    $region3: #{tpu_custom_call.1} parent=1 // loop_header
      %s17 = sphi 0, %s21
      %p18 = scmp.ge.s32.totalorder %s17, 4
      %s24 = sphi 0, %s36
      %s25 = sphi 0, %s32
      %s26 = sphi 0, %s24
      %s27 = sphi 0, %s25
      %s28 = sphi 0, %s26
      %s29 = sphi 0, %s27
      %s37 = sphi 0, %s37
      %s39 = sphi 0, %s37
      %s40 = sphi 0, %s39
      %s54 = sphi 0, %s40
      %s58 = sphi 0, %s58
      %s60 = sphi 0, %s58
      %s61 = sphi 0, %s60
      %s75 = sphi 0, %s61
      %s83 = sphi 0, %s85
      %s86 = sphi 0, %s83
      %s87 = sphi 0, %s86
      %s103 = sphi 0, %s87
      %s111 = sphi 0, %s113
      %s114 = sphi 0, %s111
      %s115 = sphi 0, %s114
      %s131 = sphi 0, %s115
    $region4: #{tpu_custom_call.1} parent=1 // loop_header_branch
      %20 = sbr.rel (%p18) target = $region8
    $region5: #{tpu_custom_call.1} parent=1 // loop_body
      %s22 = ssub.s32 %s17, 1
      %s23 = ssub.s32 %s17, 2
      %s30 = sadd.s32 1, %s25
      %p31 = scmp.ge.s32.totalorder %s30, 1
      %s32 = scalar_select %p31, 0, %s30
      %s33 = sadd.s32 1, %s24
      %s34 = scalar_select %p31, %s33, %s24
      %p35 = scmp.ge.s32.totalorder %s34, 2
      %s36 = scalar_select %p35, 0, %s34
      %s38 = sadd.s32 %s37, 1
      %p41 = scmp.eq.s32.totalorder %s17, 1
      %p42 = scmp.ne.s32.totalorder %s37, %s39
      %p43 = scmp.eq.s32.totalorder %s17, 0
      %p44 = por %p42, %p43
      %p45 = scmp.ne.s32.totalorder %s37, %s39
      %p46 = scmp.eq.s32.totalorder %s22, 1
      %p47 = por %p45, %p46
      %p48 = scmp.ne.s32.totalorder %s39, %s40
      %p49 = scmp.eq.s32.totalorder %s22, 0
      %p50 = por %p48, %p49
      %p51 = scmp.ne.s32.totalorder %s39, %s40
      %p52 = scmp.eq.s32.totalorder %s23, 1
      %p53 = por %p51, %p52
      %p55 = scmp.ne.s32.totalorder %s40, %s54
      %p56 = scmp.eq.s32.totalorder %s23, 0
      %p57 = por %p55, %p56
      %s59 = sadd.s32 %s58, 1
      %p62 = scmp.eq.s32.totalorder %s17, 1
      %p63 = scmp.ne.s32.totalorder %s58, %s60
      %p64 = scmp.eq.s32.totalorder %s17, 0
      %p65 = por %p63, %p64
      %p66 = scmp.ne.s32.totalorder %s58, %s60
      %p67 = scmp.eq.s32.totalorder %s22, 1
      %p68 = por %p66, %p67
      %p69 = scmp.ne.s32.totalorder %s60, %s61
      %p70 = scmp.eq.s32.totalorder %s22, 0
      %p71 = por %p69, %p70
      %p72 = scmp.ne.s32.totalorder %s60, %s61
      %p73 = scmp.eq.s32.totalorder %s23, 1
      %p74 = por %p72, %p73
      %p76 = scmp.ne.s32.totalorder %s61, %s75
      %p77 = scmp.eq.s32.totalorder %s23, 0
      %p78 = por %p76, %p77
      %s79 = ssub.s32 %s24, %s36
      %s80 = ssub.s32 %s25, %s32
      %s81 = sor.u32 %s79, %s80
      %p82 = scmp.eq.s32.totalorder %s81, 0
      %s84 = sadd.s32 %s83, 1
      %s85 = scalar_select %p82, %s83, %s84
      %p88 = pneg %p82
      %p89 = scmp.eq.s32.totalorder %s17, 1
      %p90 = por %p88, %p89
      %p91 = scmp.ne.s32.totalorder %s83, %s86
      %p92 = scmp.eq.s32.totalorder %s17, 0
      %p93 = por %p91, %p92
      %p94 = scmp.ne.s32.totalorder %s83, %s86
      %p95 = scmp.eq.s32.totalorder %s22, 1
      %p96 = por %p94, %p95
      %p97 = scmp.ne.s32.totalorder %s86, %s87
      %p98 = scmp.eq.s32.totalorder %s22, 0
      %p99 = por %p97, %p98
      %p100 = scmp.ne.s32.totalorder %s86, %s87
      %p101 = scmp.eq.s32.totalorder %s23, 1
      %p102 = por %p100, %p101
      %p104 = scmp.ne.s32.totalorder %s87, %s103
      %p105 = scmp.eq.s32.totalorder %s23, 0
      %p106 = por %p104, %p105
      %s107 = ssub.s32 %s24, %s36
      %s108 = ssub.s32 %s25, %s32
      %s109 = sor.u32 %s107, %s108
      %p110 = scmp.eq.s32.totalorder %s109, 0
      %s112 = sadd.s32 %s111, 1
      %s113 = scalar_select %p110, %s111, %s112
      %p116 = pneg %p110
      %p117 = scmp.eq.s32.totalorder %s17, 1
      %p118 = por %p116, %p117
      %p119 = scmp.ne.s32.totalorder %s111, %s114
      %p120 = scmp.eq.s32.totalorder %s17, 0
      %p121 = por %p119, %p120
      %p122 = scmp.ne.s32.totalorder %s111, %s114
      %p123 = scmp.eq.s32.totalorder %s22, 1
      %p124 = por %p122, %p123
      %p125 = scmp.ne.s32.totalorder %s114, %s115
      %p126 = scmp.eq.s32.totalorder %s22, 0
      %p127 = por %p125, %p126
      %p128 = scmp.ne.s32.totalorder %s114, %s115
      %p129 = scmp.eq.s32.totalorder %s23, 1
      %p130 = por %p128, %p129
      %p132 = scmp.ne.s32.totalorder %s115, %s131
      %p133 = scmp.eq.s32.totalorder %s23, 0
      %p134 = por %p132, %p133
      %p135 = scmp.le.s32.totalorder 1, %s17
      %p136 = scmp.lt.s32.totalorder %s17, 3
      %p137 = pnand %p135, %p136
      %p138 = pneg %p137
      // Predicated region
      $region9: #{tpu_custom_call.1} parent=5 // pred_check
        _
      $region10: #{tpu_custom_call.1} parent=5 // pred_check_branch
        %140 = sbr.rel (%p137) target = $region12
      $region11: #{tpu_custom_call.1} parent=5 // pred_region
        %s141 = ssub.s32 %s17, 1
        // Predicated region
        $region13: #{tpu_custom_call.1} parent=11 // pred_check
          %p142 = pneg %p50
        $region14: #{tpu_custom_call.1} parent=11 // pred_check_branch
          %144 = sbr.rel (%p142) target = $region16
        $region15: #{tpu_custom_call.1} parent=11 // pred_region
          %s146 = ssub.s32 16, 16
          %147 = vsyncadd [#allocation5], %s146
          %150 = dma.hbm_to_smem %s0, 16, [#allocation2], [#allocation5]
        $region16: #{tpu_custom_call.1} parent=11 // pred_fallthru
          _
        // Predicated region
        $region17: #{tpu_custom_call.1} parent=11 // pred_check
          %p151 = pneg %p71
        $region18: #{tpu_custom_call.1} parent=11 // pred_check_branch
          %153 = sbr.rel (%p151) target = $region20
        $region19: #{tpu_custom_call.1} parent=11 // pred_region
          %s155 = ssub.s32 16, 16
          %156 = vsyncadd [#allocation6], %s155
          %s158 = sshll.u32 %s1, 4
          %s159 = int_to_ptr.vmem [resolvable:$true] %s158
          %161 = dma.vmem_to_smem %s159, 16, [#allocation7], [#allocation6]
        $region20: #{tpu_custom_call.1} parent=11 // pred_fallthru
          _
      $region12: #{tpu_custom_call.1} parent=5 // pred_fallthru
        _
      %p162 = scmp.lt.s32.totalorder %s17, 2
      // Predicated region
      $region21: #{tpu_custom_call.1} parent=5 // pred_check
        %p163 = pneg %p162
      $region22: #{tpu_custom_call.1} parent=5 // pred_check_branch
        %165 = sbr.rel (%p163) target = $region24
      $region23: #{tpu_custom_call.1} parent=5 // pred_region
        // Predicated region
        $region25: #{tpu_custom_call.1} parent=23 // pred_check
          %p166 = pneg %p93
        $region26: #{tpu_custom_call.1} parent=23 // pred_check_branch
          %168 = sbr.rel (%p166) target = $region28
        $region27: #{tpu_custom_call.1} parent=23 // pred_region
          %s169 = sand.u32 %s83, 1
          %s170 = scalar_lea.sflag [#allocation3], %s169
          %s171 = sand.u32 %s83, 1
          %s172 = smul.addr %s171, 8
          %s173 = scalar_lea.vmem [#allocation8], %s172
          %s175 = ssub.s32 128, 128
          %176 = vsyncadd %s170, %s175
          %s177 = smul.addr %s24, 4
          %s178 = sadd.s32 %s25, %s177
          %s179 = smul.addr %s178, 32
          %s180 = scalar_lea.hbm %s2, %s179
          %s181 = sshll.u32 %s173, 4
          %s182 = int_to_ptr.vmem [resolvable:$true] %s181
          %187 = dma.hbm_to_vmem [thread:$0]  %s180, 128, %s182, %s170, 32, 32, 2
        $region28: #{tpu_custom_call.1} parent=23 // pred_fallthru
          _
      $region24: #{tpu_custom_call.1} parent=5 // pred_fallthru
        _
      %p188 = scmp.le.s32.totalorder 1, %s17
      %p189 = scmp.lt.s32.totalorder %s17, 3
      %p190 = pnand %p188, %p189
      %p191 = pneg %p190
      // Predicated region
      $region29: #{tpu_custom_call.1} parent=5 // pred_check
        _
      $region30: #{tpu_custom_call.1} parent=5 // pred_check_branch
        %193 = sbr.rel (%p190) target = $region32
      $region31: #{tpu_custom_call.1} parent=5 // pred_region
        %s194 = ssub.s32 %s17, 1
        // Predicated region
        $region33: #{tpu_custom_call.1} parent=31 // pred_check
          %p195 = pneg %p50
        $region34: #{tpu_custom_call.1} parent=31 // pred_check_branch
          %197 = sbr.rel (%p195) target = $region36
        $region35: #{tpu_custom_call.1} parent=31 // pred_region
          %198 = dma.done [#allocation5], 16
        $region36: #{tpu_custom_call.1} parent=31 // pred_fallthru
          _
        // Predicated region
        $region37: #{tpu_custom_call.1} parent=31 // pred_check
          %p199 = pneg %p71
        $region38: #{tpu_custom_call.1} parent=31 // pred_check_branch
          %201 = sbr.rel (%p199) target = $region40
        $region39: #{tpu_custom_call.1} parent=31 // pred_region
          %202 = dma.done [#allocation6], 16
        $region40: #{tpu_custom_call.1} parent=31 // pred_fallthru
          _
        %s203 = sand.u32 %s86, 1
        %s204 = scalar_lea.sflag [#allocation3], %s203
        %s205 = sand.u32 %s86, 1
        %s206 = smul.addr %s205, 8
        %s207 = scalar_lea.vmem [#allocation8], %s206
        // Predicated region
        $region41: #{tpu_custom_call.1} parent=31 // pred_check
          %p208 = pneg %p99
        $region42: #{tpu_custom_call.1} parent=31 // pred_check_branch
          %210 = sbr.rel (%p208) target = $region44
        $region43: #{tpu_custom_call.1} parent=31 // pred_region
          %211 = dma.done %s204, 128
        $region44: #{tpu_custom_call.1} parent=31 // pred_fallthru
          _
        %212 = sfence
        %p213 = pneg %p50
        %p214 = pneg %p47
        %p215 = pneg %p71
        %p216 = pneg %p68
        %s217 = sand.u32 %s86, 1
        %s218 = scalar_lea.sflag [#allocation3], %s217
        %s219 = sand.u32 %s86, 1
        %s220 = smul.addr %s219, 8
        %s221 = scalar_lea.vmem [#allocation8], %s220
        %p222 = pneg %p99
        %p223 = pneg %p96
        %p224 = pneg %p127
        %p225 = pneg %p124
        %s226 = sand.u32 %s114, 1
        %s227 = scalar_lea.sflag [#allocation4], %s226
        %s228 = sand.u32 %s114, 1
        %s229 = smul.addr %s228, 8
        %s230 = scalar_lea.vmem [#allocation9], %s229
        %v231 = vld [vmem:[%s207] sm:$0x3]
        %s232 = sld [smem:[#allocation2]]
        %v233 = vstv %s232
        %v234 = vmul.f32 %v231, %v233
        %s235 = scalar_lea.vmem %s207, 2 [#allocation8]
        %v236 = vld [vmem:[%s235] sm:$0x3]
        %s237 = sld [smem:[#allocation2 + $0x1]]
        %v238 = vstv %s237
        %v239 = vmul.f32 %v236, %v238
        %v240 = vadd.f32 %v234, %v239
        %s241 = scalar_lea.vmem %s207, 4 [#allocation8]
        %v242 = vld [vmem:[%s241] sm:$0x3]
        %s243 = sld [smem:[#allocation2 + $0x2]]
        %v244 = vstv %s243
        %v245 = vmul.f32 %v242, %v244
        %v246 = vadd.f32 %v240, %v245
        %s247 = scalar_lea.vmem %s207, 6 [#allocation8]
        %v248 = vld [vmem:[%s247] sm:$0x3]
        %s249 = sld [smem:[#allocation2 + $0x3]]
        %v250 = vstv %s249
        %v251 = vmul.f32 %v248, %v250
        %v252 = vadd.f32 %v246, %v251
        %v253 = vmax.f32 %v252, 0.0
        %s254 = sld [smem:[#allocation7]]
        %v255 = vstv %s254
        %v256 = vmul.f32 %v255, %v253
        %257 = vst [vmem:[%s230] sm:$0x3] %v256
        %s258 = sld [smem:[#allocation7 + $0x1]]
        %v259 = vstv %s258
        %v260 = vmul.f32 %v259, %v253
        %s261 = scalar_lea.vmem %s230, 2 [#allocation9]
        %262 = vst [vmem:[%s261] sm:$0x3] %v260
        %s263 = sld [smem:[#allocation7 + $0x2]]
        %v264 = vstv %s263
        %v265 = vmul.f32 %v264, %v253
        %s266 = scalar_lea.vmem %s230, 4 [#allocation9]
        %267 = vst [vmem:[%s266] sm:$0x3] %v265
        %s268 = sld [smem:[#allocation7 + $0x3]]
        %v269 = vstv %s268
        %v270 = vmul.f32 %v269, %v253
        %s271 = scalar_lea.vmem %s230, 6 [#allocation9]
        %272 = vst [vmem:[%s271] sm:$0x3] %v270
        %s273 = sand.u32 %s114, 1
        %s274 = scalar_lea.sflag [#allocation4], %s273
        %s275 = sand.u32 %s114, 1
        %s276 = smul.addr %s275, 8
        %s277 = scalar_lea.vmem [#allocation9], %s276
        // Predicated region
        $region45: #{tpu_custom_call.1} parent=31 // pred_check
          %p278 = pneg %p124
        $region46: #{tpu_custom_call.1} parent=31 // pred_check_branch
          %280 = sbr.rel (%p278) target = $region48
        $region47: #{tpu_custom_call.1} parent=31 // pred_region
          %s282 = ssub.s32 128, 128
          %283 = vsyncadd %s274, %s282
          %s284 = smul.addr %s26, 4
          %s285 = sadd.s32 %s27, %s284
          %s286 = smul.addr %s285, 32
          %s287 = scalar_lea.hbm %s3, %s286
          %s288 = sshll.u32 %s277, 4
          %s289 = int_to_ptr.vmem [resolvable:$true] %s288
          %294 = dma.vmem_to_hbm [thread:$0]  %s289, 128, %s287, %s274, 32, 32, 2
        $region48: #{tpu_custom_call.1} parent=31 // pred_fallthru
          _
      $region32: #{tpu_custom_call.1} parent=5 // pred_fallthru
        _
      %p295 = scmp.le.s32.totalorder 2, %s17
      // Predicated region
      $region49: #{tpu_custom_call.1} parent=5 // pred_check
        %p296 = pneg %p295
      $region50: #{tpu_custom_call.1} parent=5 // pred_check_branch
        %298 = sbr.rel (%p296) target = $region52
      $region51: #{tpu_custom_call.1} parent=5 // pred_region
        %s299 = ssub.s32 %s17, 2
        // Predicated region
        $region53: #{tpu_custom_call.1} parent=51 // pred_check
          %p300 = pneg %p130
        $region54: #{tpu_custom_call.1} parent=51 // pred_check_branch
          %302 = sbr.rel (%p300) target = $region56
        $region55: #{tpu_custom_call.1} parent=51 // pred_region
          %s303 = sand.u32 %s115, 1
          %s304 = scalar_lea.sflag [#allocation4], %s303
          %s305 = sand.u32 %s115, 1
          %s306 = smul.addr %s305, 8
          %s307 = scalar_lea.vmem [#allocation9], %s306
          %308 = dma.done %s304, 128
        $region56: #{tpu_custom_call.1} parent=51 // pred_fallthru
          _
      $region52: #{tpu_custom_call.1} parent=5 // pred_fallthru
        _
    $region6: #{tpu_custom_call.1} parent=1 // loop_footer
      %s21 = sadd.s32 1, %s17
    $region7: #{tpu_custom_call.1} parent=1 // loop_footer_branch
      %16 = sbr.rel target = $region3
    $region8: #{tpu_custom_call.1} parent=1 // loop_exit
      _
    %309 = vsyncpa [#allocation3], 1
    %s310 = scalar_lea.sflag [#allocation3], 1
    %311 = vsyncpa %s310, 1
    %312 = vsyncpa [#allocation4], 1
    %s313 = scalar_lea.sflag [#allocation4], 1
    %314 = vsyncpa %s313, 1
    %315 = vsyncpa [#allocation5], 1
    %s316 = scalar_lea.sflag [#allocation5], 1
    %317 = vsyncpa %s316, 1
    %318 = vsyncpa [#allocation6], 1
    %s319 = scalar_lea.sflag [#allocation6], 1
    %320 = vsyncpa %s319, 1

</llo_original>
